<compile_context>
chip_gen: v5e
topology: v5e:2x2
jax: 0.10.0
libtpu: 0.0.40
codegen_flags: <defaults>
</compile_context>

<pallas_src>
import functools

import jax
import jax.numpy as jnp
from jax import lax
from jax.experimental import pallas as pl
from jax.experimental.pallas import tpu as pltpu


def _unpool_kernel(x_ref, o_ref, *, stride: int, chunk: int):
    """One grid step: zero-insertion upsample R flattened rows.

    x_ref : (R, W)       -- one input row per (n, c, h) triple.
    o_ref : (R, s*W*s)   -- the s output image-rows produced by that input
                            row, already in final memory order:
                            [interleaved row (Ws) | (s-1)*Ws zeros].
    """
    s = stride
    R, W = x_ref.shape
    Ws = W * s
    tail_w = (s - 1) * Ws

    # Loop-invariant keep-mask for one chunk of rows (hoisted: JAX does not
    # CSE broadcast_in_dim, so rebuilding it per iteration repeats VPU work).
    keep_full = (lax.broadcasted_iota(jnp.int32, (chunk, Ws), 1) % s) == 0

    def emit(r0, rows, keep):
        xs = x_ref[pl.ds(r0, rows), :]                          # (rows, W)
        # Stretch each input row by s along the lane axis ...
        up = jnp.broadcast_to(xs[:, :, None], (rows, W, s)).reshape(rows, Ws)
        # ... and force *exact* zeros at the inserted lanes (never value*0,
        # so inf/nan inputs cannot leak into the zero positions).
        inter = jnp.where(keep, up, jnp.zeros_like(up))
        o_ref[pl.ds(r0, rows), pl.ds(0, Ws)] = inter
        o_ref[pl.ds(r0, rows), pl.ds(Ws, tail_w)] = jnp.zeros(
            (rows, tail_w), o_ref.dtype
        )

    # Walk the block in fixed-size row chunks so the (rows, W, s) stretch
    # intermediate stays small (bounded vreg / VMEM pressure) no matter how
    # large the DMA block is.
    n_full = R // chunk
    rem = R - n_full * chunk
    if n_full == 1:
        emit(0, chunk, keep_full)
    elif n_full > 1:
        def body(i, carry):
            start = i * chunk
            if chunk % 8 == 0:
                start = pl.multiple_of(start, 8)
            emit(start, chunk, keep_full)
            return carry

        lax.fori_loop(0, n_full, body, 0)
    if rem > 0:
        emit(n_full * chunk, rem, keep_full[:rem, :])


def _vmem_budget_bytes() -> int:
    """Usable VMEM budget for this kernel, gated on the TPU generation."""
    cap = 64 << 20  # conservative default (v7x has 64 MiB per TensorCore)
    try:
        cap = int(getattr(pltpu.get_tpu_info(), "vmem_capacity_bytes", cap))
    except Exception:
        pass
    # Leave headroom for compiler-internal scratch: ~96 MiB on 128 MiB parts
    # (v5e / v6e), 48 MiB on 64 MiB parts (v7x).
    return int(min(max(32 << 20, (cap * 3) // 4), 96 << 20))


def _pick_block_rows(total_rows: int, cap_rows: int) -> int:
    """Largest multiple-of-8 divisor of total_rows that is <= cap_rows.

    A divisor avoids a ragged last block (no masked writeback, balanced
    megacore split); a multiple of 8 keeps the second-minor block dim on the
    sublane tile. Falls back to the full row count (always layout-legal).
    """
    cap_rows = max(1, min(cap_rows, total_rows))
    r = (cap_rows // 8) * 8
    while r >= 8:
        if total_rows % r == 0:
            return r
        r -= 8
    return total_rows


def unpool(x: jax.Array, stride: int = 2, *, block_payload_bytes=None) -> jax.Array:
    """Pallas TPU equivalent of Unpool.forward for NCHW input.

    Matches F.conv_transpose2d(x, w, stride=stride, groups=C) with the
    module's fixed one-hot weight w[:, :, 0, 0] = 1 (zero-insertion upsample).
    """
    N, C, H, W = x.shape
    s = int(stride)
    if s == 1:
        return x  # 1x1 one-hot kernel with stride 1 is the identity
    Hs, Ws = H * s, W * s
    itemsize = jnp.dtype(x.dtype).itemsize

    # Lane-dense flattened view: one row per (n, c, h); each output row holds
    # the s output image-rows it produces, already in final memory order.
    # Both reshapes (input and output) are pure row-major bitcasts.
    total_rows = N * C * H
    row_out = s * Ws

    budget = _vmem_budget_bytes()
    if block_payload_bytes is None:
        # Bigger steps amortize the ~0.35 us/step overhead; size by generation.
        block_payload_bytes = (16 << 20) if budget > (64 << 20) else (10 << 20)

    per_row_io = (W + row_out) * itemsize             # HBM bytes per row (in+out)
    rows_payload = max(8, block_payload_bytes // per_row_io)
    rows_vmem = max(8, (budget - (12 << 20)) // (2 * per_row_io))  # double-buffered
    rows_cap = min(rows_payload, rows_vmem, max(8, total_rows // 4))
    R = _pick_block_rows(total_rows, rows_cap)
    grid = (total_rows // R,)

    # In-kernel chunk size: bounds the (chunk, W, s) stretch intermediate to
    # ~2 MiB even in its worst-case (8,128)-padded layout.
    slab = -(-W // 8) * 4096
    chunk = max(8, min(256, (((2 << 20) // slab) // 8) * 8))
    chunk = max(1, min(chunk, R))

    # VMEM bookkeeping: double-buffered in/out blocks + bounded in-kernel
    # temps + margin (no resident mask, no full-block expanded intermediate).
    in_block = R * W * itemsize
    out_block = R * row_out * itemsize
    temps = chunk * slab + 3 * chunk * Ws * 4
    vmem_need = 2 * (in_block + out_block) + temps + (4 << 20)
    vmem_limit = int(min(budget, max(32 << 20, vmem_need)))

    x2 = x.reshape(total_rows, W)
    kernel = functools.partial(_unpool_kernel, stride=s, chunk=chunk)

    out2 = pl.pallas_call(
        kernel,
        out_shape=jax.ShapeDtypeStruct((total_rows, row_out), x.dtype),
        grid_spec=pltpu.PrefetchScalarGridSpec(
            num_scalar_prefetch=0,
            grid=grid,
            in_specs=[pl.BlockSpec((R, W), lambda i: (i, 0))],
            out_specs=pl.BlockSpec((R, row_out), lambda i: (i, 0)),
        ),
        compiler_params=pltpu.CompilerParams(
            dimension_semantics=("parallel",),  # megacore splits the row axis
            vmem_limit_bytes=vmem_limit,
        ),
        cost_estimate=pl.CostEstimate(
            flops=0,
            transcendentals=0,
            bytes_accessed=total_rows * per_row_io,
        ),
    )(x2)

    return out2.reshape(N, C, Hs, Ws)


def _reference_unpool(x: jax.Array, weights: jax.Array, stride: int) -> jax.Array:
    # Pure-JAX reference of F.conv_transpose2d(x, weights, stride, groups=C)
    # with the one-hot weight: zero-insertion upsample.
    N, C, H, W = x.shape
    out = jnp.zeros((N, C, H * stride, W * stride), x.dtype)
    out = out.at[:, :, ::stride, ::stride].set(
        x * weights[None, :, 0, 0, 0, None, None]
    )
    return out


if __name__ == "__main__":
    num_channels = 4
    stride = 2

    # Deterministic parameter init matching Unpool.__init__:
    # weights[c, 0, 0, 0] = 1, everything else 0.
    weights = jnp.zeros((num_channels, 1, stride, stride), jnp.float32)
    weights = weights.at[:, :, 0, 0].set(1.0)

    # The kernel hard-codes this one-hot pattern; assert the weights match it.
    expected_w = (
        jnp.zeros((num_channels, 1, stride, stride), jnp.float32)
        .at[:, :, 0, 0]
        .set(1.0)
    )
    assert jnp.array_equal(weights, expected_w), "Unpool weights are not one-hot"

    key = jax.random.PRNGKey(0)
    x = jax.random.normal(key, (2, num_channels, 16, 16), dtype=jnp.float32)

    out = jax.block_until_ready(unpool(x, stride=stride))

    ref = _reference_unpool(x, weights, stride)
    assert out.shape == (2, num_channels, 32, 32)
    assert jnp.allclose(out, ref, atol=1e-6), "mismatch vs reference"

    print("KERNEL_OK")
</pallas_src>

<mosaic_0001>
module attributes {stable_mosaic.version = 11 : i64} {
  func.func @_unpool_kernel(%arg0: i32, %arg1: memref<32x16xf32, #tpu.memory_space<vmem>>, %arg2: memref<32x64xf32, #tpu.memory_space<vmem>>) attributes {dimension_semantics = [#tpu.dimension_semantics<parallel>], iteration_bounds = array<i64: 4>, scalar_prefetch = 0 : i64, scratch_operands = 0 : i64, tpu.core_type = #tpu.core_type<tc>, window_params = [{transform_indices = @transform_0, window_bounds = array<i64: 32, 16>}, {transform_indices = @transform_1, window_bounds = array<i64: 32, 64>}]} {
    %0 = tpu.iota {dimensions = array<i32: 1>} : vector<32x32xi32>
    %c2_i32 = arith.constant 2 : i32
    %c0_i32 = arith.constant 0 : i32
    %1 = arith.cmpi eq, %c2_i32, %c0_i32 : i32
    %c1_i32 = arith.constant 1 : i32
    %2 = arith.select %1, %c1_i32, %c2_i32 : i32
    %3 = vector.broadcast %2 : i32 to vector<32x32xi32>
    %4 = arith.remsi %0, %3 : vector<32x32xi32>
    %c0_i32_0 = arith.constant 0 : i32
    %5 = vector.broadcast %c0_i32_0 : i32 to vector<32x32xi32>
    %6 = arith.cmpi ne, %4, %5 : vector<32x32xi32>
    %c0_i32_1 = arith.constant 0 : i32
    %7 = vector.broadcast %c0_i32_1 : i32 to vector<32x32xi32>
    %8 = arith.cmpi slt, %4, %7 : vector<32x32xi32>
    %c0_i32_2 = arith.constant 0 : i32
    %9 = arith.cmpi slt, %2, %c0_i32_2 : i32
    %10 = vector.broadcast %9 : i1 to vector<32x32xi1>
    %11 = vector.broadcast %10 : vector<32x32xi1> to vector<32x32xi1>
    %12 = arith.xori %8, %11 : vector<32x32xi1>
    %13 = arith.andi %12, %6 : vector<32x32xi1>
    %14 = vector.broadcast %2 : i32 to vector<32x32xi32>
    %15 = arith.addi %4, %14 : vector<32x32xi32>
    %16 = arith.select %13, %15, %4 : vector<32x32xi1>, vector<32x32xi32>
    %c0_i32_3 = arith.constant 0 : i32
    %17 = vector.broadcast %c0_i32_3 : i32 to vector<32x32xi32>
    %18 = arith.cmpi eq, %16, %17 : vector<32x32xi32>
    %c0 = arith.constant 0 : index
    %c0_4 = arith.constant 0 : index
    %19 = vector.load %arg1[%c0, %c0_4] : memref<32x16xf32, #tpu.memory_space<vmem>>, vector<32x16xf32>
    %20 = vector.shape_cast %19 : vector<32x16xf32> to vector<32x16x1xf32>
    %21 = vector.shape_cast %20 : vector<32x16x1xf32> to vector<32x16x1xf32>
    %22 = vector.broadcast %21 : vector<32x16x1xf32> to vector<32x16x2xf32>
    %23 = vector.shape_cast %22 : vector<32x16x2xf32> to vector<32x32xf32>
    %cst = arith.constant 0.000000e+00 : f32
    %24 = vector.broadcast %cst : f32 to vector<32x32xf32>
    %25 = arith.select %18, %23, %24 : vector<32x32xi1>, vector<32x32xf32>
    %c0_5 = arith.constant 0 : index
    %c0_6 = arith.constant 0 : index
    %26 = vector.load %arg2[%c0_5, %c0_6] : memref<32x64xf32, #tpu.memory_space<vmem>>, vector<32x32xf32>
    tpu.vector_store %arg2[%c0_5, %c0_6], %25 {strides = array<i32>} : memref<32x64xf32, #tpu.memory_space<vmem>>, vector<32x32xf32>,
    %cst_7 = arith.constant 0.000000e+00 : f32
    %27 = vector.broadcast %cst_7 : f32 to vector<32x32xf32>
    %c0_8 = arith.constant 0 : index
    %c32 = arith.constant 32 : index
    %28 = vector.load %arg2[%c0_8, %c32] : memref<32x64xf32, #tpu.memory_space<vmem>>, vector<32x32xf32>
    tpu.vector_store %arg2[%c0_8, %c32], %27 {strides = array<i32>} : memref<32x64xf32, #tpu.memory_space<vmem>>, vector<32x32xf32>,
    return
  }
  func.func @transform_0(%arg0: i32) -> (i32, i32) {
    %c0_i32 = arith.constant 0 : i32
    %c0_i32_0 = arith.constant 0 : i32
    return %arg0, %c0_i32 : i32, i32
  }
  func.func @transform_1(%arg0: i32) -> (i32, i32) {
    %c0_i32 = arith.constant 0 : i32
    %c0_i32_0 = arith.constant 0 : i32
    return %arg0, %c0_i32 : i32, i32
  }
}

</mosaic_0001>

<llo_original>
// kernel: tpu_custom_call.1
$region0: #{tpu_custom_call.1}
  #allocation0 [shape = 'u32[]', space=smem, size = 0x4, offset = 0x4, fixed_abs, tag = 'smem constant byte address 0x4 - core index']
  #allocation1 [shape = 'u32[72,128]{1,0:T(1,128)}', space=vmem, size = 0x9000, scoped, tag = 'internal scratch']
  %s0 = inlined_call_operand.vmem [shape: f32[128,16], index: 0, kind: input, shape index: {}]
  %s1 = inlined_call_operand.vmem [shape: f32[128,64], index: 1, kind: output, shape index: {}]
  %s2 = sld [smem:[#allocation0]]
  $region37: #{tpu_custom_call.1} parent=0
    _
  %s4 = ssub.s32 1, %s2
  %s5 = scalar_select 0, %s4, %s2
  loop: start=0, step=1, limit=6
  $region2: #{tpu_custom_call.1} parent=0 // loop_pre_header
    _
  $region3: #{tpu_custom_call.1} parent=0 // loop_header
    %s7 = sphi 0, %s11
    %p8 = scmp.ge.s32.totalorder %s7, 6
    %s17 = sphi 0, %s19
    %s20 = sphi 0, %s17
    %s21 = sphi 0, %s20
    %s37 = sphi 0, %s21
    %s43 = sphi 0, %s45
    %s46 = sphi 0, %s43
    %s47 = sphi 0, %s46
    %s63 = sphi 0, %s47
  $region4: #{tpu_custom_call.1} parent=0 // loop_header_branch
    %10 = sbr.rel (%p8) target = $region8
  $region5: #{tpu_custom_call.1} parent=0 // loop_body
    %s12 = ssub.s32 %s7, 1
    %s13 = ssub.s32 %s7, 2
    %s14 = sadd.s32 %s7, 1
    %s15 = ssub.s32 %s7, %s14
    %p16 = scmp.eq.s32.totalorder %s15, 0
    %s18 = sadd.s32 %s17, 1
    %s19 = scalar_select %p16, %s17, %s18
    %p22 = pneg %p16
    %p23 = scmp.eq.s32.totalorder %s7, 3
    %p24 = por %p22, %p23
    %p25 = scmp.ne.s32.totalorder %s17, %s20
    %p26 = scmp.eq.s32.totalorder %s7, 0
    %p27 = por %p25, %p26
    %p28 = scmp.ne.s32.totalorder %s17, %s20
    %p29 = scmp.eq.s32.totalorder %s12, 3
    %p30 = por %p28, %p29
    %p31 = scmp.ne.s32.totalorder %s20, %s21
    %p32 = scmp.eq.s32.totalorder %s12, 0
    %p33 = por %p31, %p32
    %p34 = scmp.ne.s32.totalorder %s20, %s21
    %p35 = scmp.eq.s32.totalorder %s13, 3
    %p36 = por %p34, %p35
    %p38 = scmp.ne.s32.totalorder %s21, %s37
    %p39 = scmp.eq.s32.totalorder %s13, 0
    %p40 = por %p38, %p39
    %s41 = ssub.s32 %s7, %s14
    %p42 = scmp.eq.s32.totalorder %s41, 0
    %s44 = sadd.s32 %s43, 1
    %s45 = scalar_select %p42, %s43, %s44
    %p48 = pneg %p42
    %p49 = scmp.eq.s32.totalorder %s7, 3
    %p50 = por %p48, %p49
    %p51 = scmp.ne.s32.totalorder %s43, %s46
    %p52 = scmp.eq.s32.totalorder %s7, 0
    %p53 = por %p51, %p52
    %p54 = scmp.ne.s32.totalorder %s43, %s46
    %p55 = scmp.eq.s32.totalorder %s12, 3
    %p56 = por %p54, %p55
    %p57 = scmp.ne.s32.totalorder %s46, %s47
    %p58 = scmp.eq.s32.totalorder %s12, 0
    %p59 = por %p57, %p58
    %p60 = scmp.ne.s32.totalorder %s46, %s47
    %p61 = scmp.eq.s32.totalorder %s13, 3
    %p62 = por %p60, %p61
    %p64 = scmp.ne.s32.totalorder %s47, %s63
    %p65 = scmp.eq.s32.totalorder %s13, 0
    %p66 = por %p64, %p65
    %p67 = scmp.le.s32.totalorder 1, %s7
    %p68 = scmp.lt.s32.totalorder %s7, 5
    %p69 = pnand %p67, %p68
    %p70 = pneg %p69
    // Predicated region
    $region9: #{tpu_custom_call.1} parent=5 // pred_check
      _
    $region10: #{tpu_custom_call.1} parent=5 // pred_check_branch
      %72 = sbr.rel (%p69) target = $region12
    $region11: #{tpu_custom_call.1} parent=5 // pred_region
      %s73 = ssub.s32 %s7, 1
    $region12: #{tpu_custom_call.1} parent=5 // pred_fallthru
      _
    %p74 = scmp.lt.s32.totalorder %s7, 4
    // Predicated region
    $region13: #{tpu_custom_call.1} parent=5 // pred_check
      %p75 = pneg %p74
    $region14: #{tpu_custom_call.1} parent=5 // pred_check_branch
      %77 = sbr.rel (%p75) target = $region16
    $region15: #{tpu_custom_call.1} parent=5 // pred_region
      // Predicated region
      $region17: #{tpu_custom_call.1} parent=15 // pred_check
        %p78 = pneg %p27
      $region18: #{tpu_custom_call.1} parent=15 // pred_check_branch
        %80 = sbr.rel (%p78) target = $region20
      $region19: #{tpu_custom_call.1} parent=15 // pred_region
        %s81 = smul.u32 4, %s7
        %p82 = scmp.lt.s32.totalorder %s81, 15
        %s83 = scalar_select %p82, %s81, 15
        %s84 = smul.addr %s83, 8
        %s85 = scalar_lea.vmem %s0, %s84
        %s86 = smul.u32 4, %s7
      $region20: #{tpu_custom_call.1} parent=15 // pred_fallthru
        _
    $region16: #{tpu_custom_call.1} parent=5 // pred_fallthru
      _
    %p87 = scmp.le.s32.totalorder 1, %s7
    %p88 = scmp.lt.s32.totalorder %s7, 5
    %p89 = pnand %p87, %p88
    %p90 = pneg %p89
    // Predicated region
    $region21: #{tpu_custom_call.1} parent=5 // pred_check
      _
    $region22: #{tpu_custom_call.1} parent=5 // pred_check_branch
      %92 = sbr.rel (%p89) target = $region24
    $region23: #{tpu_custom_call.1} parent=5 // pred_region
      %s93 = ssub.s32 %s7, 1
      %s94 = smul.u32 4, %s12
      %p95 = scmp.lt.s32.totalorder %s94, 15
      %s96 = scalar_select %p95, %s94, 15
      %s97 = smul.addr %s96, 8
      %s98 = scalar_lea.vmem %s0, %s97
      %p99 = pneg %p33
      %p100 = pneg %p30
      %p101 = pneg %p59
      %p102 = pneg %p56
      %s103 = smul.u32 4, %s12
      %p104 = scmp.lt.s32.totalorder %s103, 15
      %s105 = scalar_select %p104, %s103, 15
      %s106 = smul.addr %s105, 8
      %s107 = scalar_lea.vmem %s1, %s106
      %s108 = smul.u32 4, %s12
      %p109 = scmp.lt.s32.totalorder %s108, 15
      %s110 = scalar_select %p109, %s108, 15
      %s111 = smul.addr %s110, 8
      %s112 = scalar_lea.vmem %s0, %s111
      %s113 = smul.u32 4, %s12
      %s114 = smul.u32 4, %s12
      %p115 = scmp.lt.s32.totalorder %s114, 15
      %s116 = scalar_select %p115, %s114, 15
      %s117 = smul.addr %s116, 8
      %s118 = scalar_lea.vmem %s1, %s117
      %s119 = smul.u32 4, %s12
      %v120 = vlaneseq
      %v121 = vand.u32 %v120, 127
      %vm122 = vcmp.lt.s32.totalorder %v121, 0
      %v123 = vsub.s32 0, %v121
      %v124 = vsel %vm122, %v123, %v121
      %v125 = vshrl.u32 %v124, 1
      %v126 = vand.u32 %v124, 1
      %v127 = vsub.s32 0, %v126
      %v128 = vsel %vm122, %v127, %v126
      %vm129 = vcmp.ne.s32.totalorder %v128, 0
      %vm130 = vcmp.lt.s32.totalorder %v128, 0
      %vm131 = vmand %vm130, %vm129
      %v132 = vadd.s32 %v128, 2
      %v133 = vsel %vm131, %v132, %v128
      %vm134 = vcmp.eq.s32.totalorder %v133, 0
      %v135 = vld [vmem:[%s112] sm:$0xff]
      %v136 = vld [vmem:[%s112 + $0x8] sm:$0xff]
      %v137 = vld [vmem:[%s112 + $0x10] sm:$0xff]
      %v138 = vld [vmem:[%s112 + $0x18] sm:$0xff]
      %v139 = vperm.slane %v135, 0
      %v140 = vlaneseq
      %v141 = vshrl.u32 %v140, 7
      %143 = vset.pattern.permute.xlu0 %v141
      %144 = vperm.xlu0 %143, %v139
      %v145 = vpop.permute.xlu0 %144
      %v146 = vlaneseq
      %v147 = vshrl.u32 %v146, 7
      %v148 = vadd.s32 %v147, 8
      %149 = vset.pattern.permute.xlu0 %v148
      %150 = vperm.xlu0 %149, %v139
      %v151 = vpop.permute.xlu0 %150
      %v152 = vperm.slane %v135, 1
      %v153 = vlaneseq
      %v154 = vshrl.u32 %v153, 7
      %156 = vset.pattern.permute.xlu0 %v154
      %157 = vperm.xlu0 %156, %v152
      %v158 = vpop.permute.xlu0 %157
      %v159 = vlaneseq
      %v160 = vshrl.u32 %v159, 7
      %v161 = vadd.s32 %v160, 8
      %162 = vset.pattern.permute.xlu0 %v161
      %163 = vperm.xlu0 %162, %v152
      %v164 = vpop.permute.xlu0 %163
      %v165 = vperm.slane %v135, 2
      %v166 = vlaneseq
      %v167 = vshrl.u32 %v166, 7
      %169 = vset.pattern.permute.xlu0 %v167
      %170 = vperm.xlu0 %169, %v165
      %v171 = vpop.permute.xlu0 %170
      %v172 = vlaneseq
      %v173 = vshrl.u32 %v172, 7
      %v174 = vadd.s32 %v173, 8
      %175 = vset.pattern.permute.xlu0 %v174
      %176 = vperm.xlu0 %175, %v165
      %v177 = vpop.permute.xlu0 %176
      %v178 = vperm.slane %v135, 3
      %v179 = vlaneseq
      %v180 = vshrl.u32 %v179, 7
      %182 = vset.pattern.permute.xlu0 %v180
      %183 = vperm.xlu0 %182, %v178
      %v184 = vpop.permute.xlu0 %183
      %v185 = vlaneseq
      %v186 = vshrl.u32 %v185, 7
      %v187 = vadd.s32 %v186, 8
      %188 = vset.pattern.permute.xlu0 %v187
      %189 = vperm.xlu0 %188, %v178
      %v190 = vpop.permute.xlu0 %189
      %v191 = vperm.slane %v135, 4
      %v192 = vlaneseq
      %v193 = vshrl.u32 %v192, 7
      %195 = vset.pattern.permute.xlu0 %v193
      %196 = vperm.xlu0 %195, %v191
      %v197 = vpop.permute.xlu0 %196
      %v198 = vlaneseq
      %v199 = vshrl.u32 %v198, 7
      %v200 = vadd.s32 %v199, 8
      %201 = vset.pattern.permute.xlu0 %v200
      %202 = vperm.xlu0 %201, %v191
      %v203 = vpop.permute.xlu0 %202
      %v204 = vperm.slane %v135, 5
      %v205 = vlaneseq
      %v206 = vshrl.u32 %v205, 7
      %208 = vset.pattern.permute.xlu0 %v206
      %209 = vperm.xlu0 %208, %v204
      %v210 = vpop.permute.xlu0 %209
      %v211 = vlaneseq
      %v212 = vshrl.u32 %v211, 7
      %v213 = vadd.s32 %v212, 8
      %214 = vset.pattern.permute.xlu0 %v213
      %215 = vperm.xlu0 %214, %v204
      %v216 = vpop.permute.xlu0 %215
      %v217 = vperm.slane %v135, 6
      %v218 = vlaneseq
      %v219 = vshrl.u32 %v218, 7
      %221 = vset.pattern.permute.xlu0 %v219
      %222 = vperm.xlu0 %221, %v217
      %v223 = vpop.permute.xlu0 %222
      %v224 = vlaneseq
      %v225 = vshrl.u32 %v224, 7
      %v226 = vadd.s32 %v225, 8
      %227 = vset.pattern.permute.xlu0 %v226
      %228 = vperm.xlu0 %227, %v217
      %v229 = vpop.permute.xlu0 %228
      %v230 = vperm.slane %v135, 7
      %v231 = vlaneseq
      %v232 = vshrl.u32 %v231, 7
      %234 = vset.pattern.permute.xlu0 %v232
      %235 = vperm.xlu0 %234, %v230
      %v236 = vpop.permute.xlu0 %235
      %v237 = vlaneseq
      %v238 = vshrl.u32 %v237, 7
      %v239 = vadd.s32 %v238, 8
      %240 = vset.pattern.permute.xlu0 %v239
      %241 = vperm.xlu0 %240, %v230
      %v242 = vpop.permute.xlu0 %241
      %v243 = vperm.slane %v136, 0
      %v244 = vlaneseq
      %v245 = vshrl.u32 %v244, 7
      %247 = vset.pattern.permute.xlu0 %v245
      %248 = vperm.xlu0 %247, %v243
      %v249 = vpop.permute.xlu0 %248
      %v250 = vlaneseq
      %v251 = vshrl.u32 %v250, 7
      %v252 = vadd.s32 %v251, 8
      %253 = vset.pattern.permute.xlu0 %v252
      %254 = vperm.xlu0 %253, %v243
      %v255 = vpop.permute.xlu0 %254
      %v256 = vperm.slane %v136, 1
      %v257 = vlaneseq
      %v258 = vshrl.u32 %v257, 7
      %260 = vset.pattern.permute.xlu0 %v258
      %261 = vperm.xlu0 %260, %v256
      %v262 = vpop.permute.xlu0 %261
      %v263 = vlaneseq
      %v264 = vshrl.u32 %v263, 7
      %v265 = vadd.s32 %v264, 8
      %266 = vset.pattern.permute.xlu0 %v265
      %267 = vperm.xlu0 %266, %v256
      %v268 = vpop.permute.xlu0 %267
      %v269 = vperm.slane %v136, 2
      %v270 = vlaneseq
      %v271 = vshrl.u32 %v270, 7
      %273 = vset.pattern.permute.xlu0 %v271
      %274 = vperm.xlu0 %273, %v269
      %v275 = vpop.permute.xlu0 %274
      %v276 = vlaneseq
      %v277 = vshrl.u32 %v276, 7
      %v278 = vadd.s32 %v277, 8
      %279 = vset.pattern.permute.xlu0 %v278
      %280 = vperm.xlu0 %279, %v269
      %v281 = vpop.permute.xlu0 %280
      %v282 = vperm.slane %v136, 3
      %v283 = vlaneseq
      %v284 = vshrl.u32 %v283, 7
      %286 = vset.pattern.permute.xlu0 %v284
      %287 = vperm.xlu0 %286, %v282
      %v288 = vpop.permute.xlu0 %287
      %v289 = vlaneseq
      %v290 = vshrl.u32 %v289, 7
      %v291 = vadd.s32 %v290, 8
      %292 = vset.pattern.permute.xlu0 %v291
      %293 = vperm.xlu0 %292, %v282
      %v294 = vpop.permute.xlu0 %293
      %v295 = vperm.slane %v136, 4
      %v296 = vlaneseq
      %v297 = vshrl.u32 %v296, 7
      %299 = vset.pattern.permute.xlu0 %v297
      %300 = vperm.xlu0 %299, %v295
      %v301 = vpop.permute.xlu0 %300
      %v302 = vlaneseq
      %v303 = vshrl.u32 %v302, 7
      %v304 = vadd.s32 %v303, 8
      %305 = vset.pattern.permute.xlu0 %v304
      %306 = vperm.xlu0 %305, %v295
      %v307 = vpop.permute.xlu0 %306
      %v308 = vperm.slane %v136, 5
      %v309 = vlaneseq
      %v310 = vshrl.u32 %v309, 7
      %312 = vset.pattern.permute.xlu0 %v310
      %313 = vperm.xlu0 %312, %v308
      %v314 = vpop.permute.xlu0 %313
      %v315 = vlaneseq
      %v316 = vshrl.u32 %v315, 7
      %v317 = vadd.s32 %v316, 8
      %318 = vset.pattern.permute.xlu0 %v317
      %319 = vperm.xlu0 %318, %v308
      %v320 = vpop.permute.xlu0 %319
      %v321 = vperm.slane %v136, 6
      %v322 = vlaneseq
      %v323 = vshrl.u32 %v322, 7
      %325 = vset.pattern.permute.xlu0 %v323
      %326 = vperm.xlu0 %325, %v321
      %v327 = vpop.permute.xlu0 %326
      %v328 = vlaneseq
      %v329 = vshrl.u32 %v328, 7
      %v330 = vadd.s32 %v329, 8
      %331 = vset.pattern.permute.xlu0 %v330
      %332 = vperm.xlu0 %331, %v321
      %v333 = vpop.permute.xlu0 %332
      %v334 = vperm.slane %v136, 7
      %v335 = vlaneseq
      %v336 = vshrl.u32 %v335, 7
      %338 = vset.pattern.permute.xlu0 %v336
      %339 = vperm.xlu0 %338, %v334
      %v340 = vpop.permute.xlu0 %339
      %v341 = vlaneseq
      %v342 = vshrl.u32 %v341, 7
      %v343 = vadd.s32 %v342, 8
      %344 = vset.pattern.permute.xlu0 %v343
      %345 = vperm.xlu0 %344, %v334
      %v346 = vpop.permute.xlu0 %345
      %v347 = vperm.slane %v137, 0
      %v348 = vlaneseq
      %v349 = vshrl.u32 %v348, 7
      %351 = vset.pattern.permute.xlu0 %v349
      %352 = vperm.xlu0 %351, %v347
      %v353 = vpop.permute.xlu0 %352
      %v354 = vlaneseq
      %v355 = vshrl.u32 %v354, 7
      %v356 = vadd.s32 %v355, 8
      %357 = vset.pattern.permute.xlu0 %v356
      %358 = vperm.xlu0 %357, %v347
      %v359 = vpop.permute.xlu0 %358
      %v360 = vperm.slane %v137, 1
      %v361 = vlaneseq
      %v362 = vshrl.u32 %v361, 7
      %364 = vset.pattern.permute.xlu0 %v362
      %365 = vperm.xlu0 %364, %v360
      %v366 = vpop.permute.xlu0 %365
      %v367 = vlaneseq
      %v368 = vshrl.u32 %v367, 7
      %v369 = vadd.s32 %v368, 8
      %370 = vset.pattern.permute.xlu0 %v369
      %371 = vperm.xlu0 %370, %v360
      %v372 = vpop.permute.xlu0 %371
      %v373 = vperm.slane %v137, 2
      %v374 = vlaneseq
      %v375 = vshrl.u32 %v374, 7
      %377 = vset.pattern.permute.xlu0 %v375
      %378 = vperm.xlu0 %377, %v373
      %v379 = vpop.permute.xlu0 %378
      %v380 = vlaneseq
      %v381 = vshrl.u32 %v380, 7
      %v382 = vadd.s32 %v381, 8
      %383 = vset.pattern.permute.xlu0 %v382
      %384 = vperm.xlu0 %383, %v373
      %v385 = vpop.permute.xlu0 %384
      %v386 = vperm.slane %v137, 3
      %v387 = vlaneseq
      %v388 = vshrl.u32 %v387, 7
      %390 = vset.pattern.permute.xlu0 %v388
      %391 = vperm.xlu0 %390, %v386
      %v392 = vpop.permute.xlu0 %391
      %v393 = vlaneseq
      %v394 = vshrl.u32 %v393, 7
      %v395 = vadd.s32 %v394, 8
      %396 = vset.pattern.permute.xlu0 %v395
      %397 = vperm.xlu0 %396, %v386
      %v398 = vpop.permute.xlu0 %397
      %v399 = vperm.slane %v137, 4
      %v400 = vlaneseq
      %v401 = vshrl.u32 %v400, 7
      %403 = vset.pattern.permute.xlu0 %v401
      %404 = vperm.xlu0 %403, %v399
      %v405 = vpop.permute.xlu0 %404
      %v406 = vlaneseq
      %v407 = vshrl.u32 %v406, 7
      %v408 = vadd.s32 %v407, 8
      %409 = vset.pattern.permute.xlu0 %v408
      %410 = vperm.xlu0 %409, %v399
      %v411 = vpop.permute.xlu0 %410
      %v412 = vperm.slane %v137, 5
      %v413 = vlaneseq
      %v414 = vshrl.u32 %v413, 7
      %416 = vset.pattern.permute.xlu0 %v414
      %417 = vperm.xlu0 %416, %v412
      %v418 = vpop.permute.xlu0 %417
      %v419 = vlaneseq
      %v420 = vshrl.u32 %v419, 7
      %v421 = vadd.s32 %v420, 8
      %422 = vset.pattern.permute.xlu0 %v421
      %423 = vperm.xlu0 %422, %v412
      %v424 = vpop.permute.xlu0 %423
      %v425 = vperm.slane %v137, 6
      %v426 = vlaneseq
      %v427 = vshrl.u32 %v426, 7
      %429 = vset.pattern.permute.xlu0 %v427
      %430 = vperm.xlu0 %429, %v425
      %v431 = vpop.permute.xlu0 %430
      %v432 = vlaneseq
      %v433 = vshrl.u32 %v432, 7
      %v434 = vadd.s32 %v433, 8
      %435 = vset.pattern.permute.xlu0 %v434
      %436 = vperm.xlu0 %435, %v425
      %v437 = vpop.permute.xlu0 %436
      %v438 = vperm.slane %v137, 7
      %v439 = vlaneseq
      %v440 = vshrl.u32 %v439, 7
      %442 = vset.pattern.permute.xlu0 %v440
      %443 = vperm.xlu0 %442, %v438
      %v444 = vpop.permute.xlu0 %443
      %v445 = vlaneseq
      %v446 = vshrl.u32 %v445, 7
      %v447 = vadd.s32 %v446, 8
      %448 = vset.pattern.permute.xlu0 %v447
      %449 = vperm.xlu0 %448, %v438
      %v450 = vpop.permute.xlu0 %449
      %v451 = vperm.slane %v138, 0
      %v452 = vlaneseq
      %v453 = vshrl.u32 %v452, 7
      %455 = vset.pattern.permute.xlu0 %v453
      %456 = vperm.xlu0 %455, %v451
      %v457 = vpop.permute.xlu0 %456
      %v458 = vlaneseq
      %v459 = vshrl.u32 %v458, 7
      %v460 = vadd.s32 %v459, 8
      %461 = vset.pattern.permute.xlu0 %v460
      %462 = vperm.xlu0 %461, %v451
      %v463 = vpop.permute.xlu0 %462
      %v464 = vperm.slane %v138, 1
      %v465 = vlaneseq
      %v466 = vshrl.u32 %v465, 7
      %468 = vset.pattern.permute.xlu0 %v466
      %469 = vperm.xlu0 %468, %v464
      %v470 = vpop.permute.xlu0 %469
      %v471 = vlaneseq
      %v472 = vshrl.u32 %v471, 7
      %v473 = vadd.s32 %v472, 8
      %474 = vset.pattern.permute.xlu0 %v473
      %475 = vperm.xlu0 %474, %v464
      %v476 = vpop.permute.xlu0 %475
      %v477 = vperm.slane %v138, 2
      %v478 = vlaneseq
      %v479 = vshrl.u32 %v478, 7
      %481 = vset.pattern.permute.xlu0 %v479
      %482 = vperm.xlu0 %481, %v477
      %v483 = vpop.permute.xlu0 %482
      %v484 = vlaneseq
      %v485 = vshrl.u32 %v484, 7
      %v486 = vadd.s32 %v485, 8
      %487 = vset.pattern.permute.xlu0 %v486
      %488 = vperm.xlu0 %487, %v477
      %v489 = vpop.permute.xlu0 %488
      %v490 = vperm.slane %v138, 3
      %v491 = vlaneseq
      %v492 = vshrl.u32 %v491, 7
      %494 = vset.pattern.permute.xlu0 %v492
      %495 = vperm.xlu0 %494, %v490
      %v496 = vpop.permute.xlu0 %495
      %v497 = vlaneseq
      %v498 = vshrl.u32 %v497, 7
      %v499 = vadd.s32 %v498, 8
      %500 = vset.pattern.permute.xlu0 %v499
      %501 = vperm.xlu0 %500, %v490
      %v502 = vpop.permute.xlu0 %501
      %v503 = vperm.slane %v138, 4
      %v504 = vlaneseq
      %v505 = vshrl.u32 %v504, 7
      %507 = vset.pattern.permute.xlu0 %v505
      %508 = vperm.xlu0 %507, %v503
      %v509 = vpop.permute.xlu0 %508
      %v510 = vlaneseq
      %v511 = vshrl.u32 %v510, 7
      %v512 = vadd.s32 %v511, 8
      %513 = vset.pattern.permute.xlu0 %v512
      %514 = vperm.xlu0 %513, %v503
      %v515 = vpop.permute.xlu0 %514
      %v516 = vperm.slane %v138, 5
      %v517 = vlaneseq
      %v518 = vshrl.u32 %v517, 7
      %520 = vset.pattern.permute.xlu0 %v518
      %521 = vperm.xlu0 %520, %v516
      %v522 = vpop.permute.xlu0 %521
      %v523 = vlaneseq
      %v524 = vshrl.u32 %v523, 7
      %v525 = vadd.s32 %v524, 8
      %526 = vset.pattern.permute.xlu0 %v525
      %527 = vperm.xlu0 %526, %v516
      %v528 = vpop.permute.xlu0 %527
      %v529 = vperm.slane %v138, 6
      %v530 = vlaneseq
      %v531 = vshrl.u32 %v530, 7
      %533 = vset.pattern.permute.xlu0 %v531
      %534 = vperm.xlu0 %533, %v529
      %v535 = vpop.permute.xlu0 %534
      %v536 = vlaneseq
      %v537 = vshrl.u32 %v536, 7
      %v538 = vadd.s32 %v537, 8
      %539 = vset.pattern.permute.xlu0 %v538
      %540 = vperm.xlu0 %539, %v529
      %v541 = vpop.permute.xlu0 %540
      %v542 = vperm.slane %v138, 7
      %v543 = vlaneseq
      %v544 = vshrl.u32 %v543, 7
      %546 = vset.pattern.permute.xlu0 %v544
      %547 = vperm.xlu0 %546, %v542
      %v548 = vpop.permute.xlu0 %547
      %v549 = vlaneseq
      %v550 = vshrl.u32 %v549, 7
      %v551 = vadd.s32 %v550, 8
      %552 = vset.pattern.permute.xlu0 %v551
      %553 = vperm.xlu0 %552, %v542
      %v554 = vpop.permute.xlu0 %553
      %v555 = vrot.slane %v171, 4
      %vm556 = vcmask 1047556
      %v557 = vsel %vm556, %v555, %v145
      %v558 = vrot.slane %v145, 4
      %v559 = vsel %vm556, %v171, %v558
      %v561 = vunpack.c.l.s4 1983009808
      %v562 = vunpack.c.0.s8 %v561
      %v563 = vperm.slane %v557, %v562
      %v565 = vunpack.c.l.s4 1983009808
      %v566 = vunpack.c.0.s8 %v565
      %v567 = vperm.slane %v559, %v566
      %v568 = vrot.slane %v184, 4
      %v569 = vsel %vm556, %v568, %v158
      %v570 = vrot.slane %v158, 4
      %v571 = vsel %vm556, %v184, %v570
      %v573 = vunpack.c.l.s4 1983009808
      %v574 = vunpack.c.0.s8 %v573
      %v575 = vperm.slane %v569, %v574
      %v577 = vunpack.c.l.s4 1983009808
      %v578 = vunpack.c.0.s8 %v577
      %v579 = vperm.slane %v571, %v578
      %v580 = vrot.slane %v223, 4
      %v581 = vsel %vm556, %v580, %v197
      %v582 = vrot.slane %v197, 4
      %v583 = vsel %vm556, %v223, %v582
      %v585 = vunpack.c.l.s4 1983009808
      %v586 = vunpack.c.0.s8 %v585
      %v587 = vperm.slane %v581, %v586
      %v589 = vunpack.c.l.s4 1983009808
      %v590 = vunpack.c.0.s8 %v589
      %v591 = vperm.slane %v583, %v590
      %v592 = vrot.slane %v236, 4
      %v593 = vsel %vm556, %v592, %v210
      %v594 = vrot.slane %v210, 4
      %v595 = vsel %vm556, %v236, %v594
      %v597 = vunpack.c.l.s4 1983009808
      %v598 = vunpack.c.0.s8 %v597
      %v599 = vperm.slane %v593, %v598
      %v601 = vunpack.c.l.s4 1983009808
      %v602 = vunpack.c.0.s8 %v601
      %v603 = vperm.slane %v595, %v602
      %v604 = vrot.slane %v575, 4
      %v605 = vsel %vm556, %v604, %v563
      %v606 = vrot.slane %v563, 4
      %v607 = vsel %vm556, %v575, %v606
      %v609 = vunpack.c.l.s4 1934713408
      %v610 = vunpack.c.0.s8 %v609
      %v611 = vperm.slane %v605, %v610
      %v613 = vunpack.c.l.s4 1934713408
      %v614 = vunpack.c.0.s8 %v613
      %v615 = vperm.slane %v607, %v614
      %v616 = vrot.slane %v579, 4
      %v617 = vsel %vm556, %v616, %v567
      %v618 = vrot.slane %v567, 4
      %v619 = vsel %vm556, %v579, %v618
      %v621 = vunpack.c.l.s4 1934713408
      %v622 = vunpack.c.0.s8 %v621
      %v623 = vperm.slane %v617, %v622
      %v625 = vunpack.c.l.s4 1934713408
      %v626 = vunpack.c.0.s8 %v625
      %v627 = vperm.slane %v619, %v626
      %v628 = vrot.slane %v599, 4
      %v629 = vsel %vm556, %v628, %v587
      %v630 = vrot.slane %v587, 4
      %v631 = vsel %vm556, %v599, %v630
      %v633 = vunpack.c.l.s4 1934713408
      %v634 = vunpack.c.0.s8 %v633
      %v635 = vperm.slane %v629, %v634
      %v637 = vunpack.c.l.s4 1934713408
      %v638 = vunpack.c.0.s8 %v637
      %v639 = vperm.slane %v631, %v638
      %v640 = vrot.slane %v603, 4
      %v641 = vsel %vm556, %v640, %v591
      %v642 = vrot.slane %v591, 4
      %v643 = vsel %vm556, %v603, %v642
      %v645 = vunpack.c.l.s4 1934713408
      %v646 = vunpack.c.0.s8 %v645
      %v647 = vperm.slane %v641, %v646
      %v649 = vunpack.c.l.s4 1934713408
      %v650 = vunpack.c.0.s8 %v649
      %v651 = vperm.slane %v643, %v650
      %v652 = vrot.slane %v635, 4
      %v653 = vsel %vm556, %v652, %v611
      %v654 = vrot.slane %v611, 4
      %v655 = vsel %vm556, %v635, %v654
      %v656 = vrot.slane %v639, 4
      %v657 = vsel %vm556, %v656, %v615
      %v658 = vrot.slane %v615, 4
      %v659 = vsel %vm556, %v639, %v658
      %v660 = vrot.slane %v647, 4
      %v661 = vsel %vm556, %v660, %v623
      %v662 = vrot.slane %v623, 4
      %v663 = vsel %vm556, %v647, %v662
      %v664 = vrot.slane %v651, 4
      %v665 = vsel %vm556, %v664, %v627
      %v666 = vrot.slane %v627, 4
      %v667 = vsel %vm556, %v651, %v666
      %v668 = vrot.slane %v275, 4
      %v669 = vsel %vm556, %v668, %v249
      %v670 = vrot.slane %v249, 4
      %v671 = vsel %vm556, %v275, %v670
      %v673 = vunpack.c.l.s4 1983009808
      %v674 = vunpack.c.0.s8 %v673
      %v675 = vperm.slane %v669, %v674
      %v677 = vunpack.c.l.s4 1983009808
      %v678 = vunpack.c.0.s8 %v677
      %v679 = vperm.slane %v671, %v678
      %v680 = vrot.slane %v288, 4
      %v681 = vsel %vm556, %v680, %v262
      %v682 = vrot.slane %v262, 4
      %v683 = vsel %vm556, %v288, %v682
      %v685 = vunpack.c.l.s4 1983009808
      %v686 = vunpack.c.0.s8 %v685
      %v687 = vperm.slane %v681, %v686
      %v689 = vunpack.c.l.s4 1983009808
      %v690 = vunpack.c.0.s8 %v689
      %v691 = vperm.slane %v683, %v690
      %v692 = vrot.slane %v327, 4
      %v693 = vsel %vm556, %v692, %v301
      %v694 = vrot.slane %v301, 4
      %v695 = vsel %vm556, %v327, %v694
      %v697 = vunpack.c.l.s4 1983009808
      %v698 = vunpack.c.0.s8 %v697
      %v699 = vperm.slane %v693, %v698
      %v701 = vunpack.c.l.s4 1983009808
      %v702 = vunpack.c.0.s8 %v701
      %v703 = vperm.slane %v695, %v702
      %v704 = vrot.slane %v340, 4
      %v705 = vsel %vm556, %v704, %v314
      %v706 = vrot.slane %v314, 4
      %v707 = vsel %vm556, %v340, %v706
      %v709 = vunpack.c.l.s4 1983009808
      %v710 = vunpack.c.0.s8 %v709
      %v711 = vperm.slane %v705, %v710
      %v713 = vunpack.c.l.s4 1983009808
      %v714 = vunpack.c.0.s8 %v713
      %v715 = vperm.slane %v707, %v714
      %v716 = vrot.slane %v687, 4
      %v717 = vsel %vm556, %v716, %v675
      %v718 = vrot.slane %v675, 4
      %v719 = vsel %vm556, %v687, %v718
      %v721 = vunpack.c.l.s4 1934713408
      %v722 = vunpack.c.0.s8 %v721
      %v723 = vperm.slane %v717, %v722
      %v725 = vunpack.c.l.s4 1934713408
      %v726 = vunpack.c.0.s8 %v725
      %v727 = vperm.slane %v719, %v726
      %v728 = vrot.slane %v691, 4
      %v729 = vsel %vm556, %v728, %v679
      %v730 = vrot.slane %v679, 4
      %v731 = vsel %vm556, %v691, %v730
      %v733 = vunpack.c.l.s4 1934713408
      %v734 = vunpack.c.0.s8 %v733
      %v735 = vperm.slane %v729, %v734
      %v737 = vunpack.c.l.s4 1934713408
      %v738 = vunpack.c.0.s8 %v737
      %v739 = vperm.slane %v731, %v738
      %v740 = vrot.slane %v711, 4
      %v741 = vsel %vm556, %v740, %v699
      %v742 = vrot.slane %v699, 4
      %v743 = vsel %vm556, %v711, %v742
      %v745 = vunpack.c.l.s4 1934713408
      %v746 = vunpack.c.0.s8 %v745
      %v747 = vperm.slane %v741, %v746
      %v749 = vunpack.c.l.s4 1934713408
      %v750 = vunpack.c.0.s8 %v749
      %v751 = vperm.slane %v743, %v750
      %v752 = vrot.slane %v715, 4
      %v753 = vsel %vm556, %v752, %v703
      %v754 = vrot.slane %v703, 4
      %v755 = vsel %vm556, %v715, %v754
      %v757 = vunpack.c.l.s4 1934713408
      %v758 = vunpack.c.0.s8 %v757
      %v759 = vperm.slane %v753, %v758
      %v761 = vunpack.c.l.s4 1934713408
      %v762 = vunpack.c.0.s8 %v761
      %v763 = vperm.slane %v755, %v762
      %v764 = vrot.slane %v747, 4
      %v765 = vsel %vm556, %v764, %v723
      %v766 = vrot.slane %v723, 4
      %v767 = vsel %vm556, %v747, %v766
      %v768 = vrot.slane %v751, 4
      %v769 = vsel %vm556, %v768, %v727
      %v770 = vrot.slane %v727, 4
      %v771 = vsel %vm556, %v751, %v770
      %v772 = vrot.slane %v759, 4
      %v773 = vsel %vm556, %v772, %v735
      %v774 = vrot.slane %v735, 4
      %v775 = vsel %vm556, %v759, %v774
      %v776 = vrot.slane %v763, 4
      %v777 = vsel %vm556, %v776, %v739
      %v778 = vrot.slane %v739, 4
      %v779 = vsel %vm556, %v763, %v778
      %v780 = vrot.slane %v379, 4
      %v781 = vsel %vm556, %v780, %v353
      %v782 = vrot.slane %v353, 4
      %v783 = vsel %vm556, %v379, %v782
      %v785 = vunpack.c.l.s4 1983009808
      %v786 = vunpack.c.0.s8 %v785
      %v787 = vperm.slane %v781, %v786
      %v789 = vunpack.c.l.s4 1983009808
      %v790 = vunpack.c.0.s8 %v789
      %v791 = vperm.slane %v783, %v790
      %v792 = vrot.slane %v392, 4
      %v793 = vsel %vm556, %v792, %v366
      %v794 = vrot.slane %v366, 4
      %v795 = vsel %vm556, %v392, %v794
      %v797 = vunpack.c.l.s4 1983009808
      %v798 = vunpack.c.0.s8 %v797
      %v799 = vperm.slane %v793, %v798
      %v801 = vunpack.c.l.s4 1983009808
      %v802 = vunpack.c.0.s8 %v801
      %v803 = vperm.slane %v795, %v802
      %v804 = vrot.slane %v431, 4
      %v805 = vsel %vm556, %v804, %v405
      %v806 = vrot.slane %v405, 4
      %v807 = vsel %vm556, %v431, %v806
      %v809 = vunpack.c.l.s4 1983009808
      %v810 = vunpack.c.0.s8 %v809
      %v811 = vperm.slane %v805, %v810
      %v813 = vunpack.c.l.s4 1983009808
      %v814 = vunpack.c.0.s8 %v813
      %v815 = vperm.slane %v807, %v814
      %v816 = vrot.slane %v444, 4
      %v817 = vsel %vm556, %v816, %v418
      %v818 = vrot.slane %v418, 4
      %v819 = vsel %vm556, %v444, %v818
      %v821 = vunpack.c.l.s4 1983009808
      %v822 = vunpack.c.0.s8 %v821
      %v823 = vperm.slane %v817, %v822
      %v825 = vunpack.c.l.s4 1983009808
      %v826 = vunpack.c.0.s8 %v825
      %v827 = vperm.slane %v819, %v826
      %v828 = vrot.slane %v799, 4
      %v829 = vsel %vm556, %v828, %v787
      %v830 = vrot.slane %v787, 4
      %v831 = vsel %vm556, %v799, %v830
      %v833 = vunpack.c.l.s4 1934713408
      %v834 = vunpack.c.0.s8 %v833
      %v835 = vperm.slane %v829, %v834
      %v837 = vunpack.c.l.s4 1934713408
      %v838 = vunpack.c.0.s8 %v837
      %v839 = vperm.slane %v831, %v838
      %v840 = vrot.slane %v803, 4
      %v841 = vsel %vm556, %v840, %v791
      %v842 = vrot.slane %v791, 4
      %v843 = vsel %vm556, %v803, %v842
      %v845 = vunpack.c.l.s4 1934713408
      %v846 = vunpack.c.0.s8 %v845
      %v847 = vperm.slane %v841, %v846
      %v849 = vunpack.c.l.s4 1934713408
      %v850 = vunpack.c.0.s8 %v849
      %v851 = vperm.slane %v843, %v850
      %v852 = vrot.slane %v823, 4
      %v853 = vsel %vm556, %v852, %v811
      %v854 = vrot.slane %v811, 4
      %v855 = vsel %vm556, %v823, %v854
      %v857 = vunpack.c.l.s4 1934713408
      %v858 = vunpack.c.0.s8 %v857
      %v859 = vperm.slane %v853, %v858
      %v861 = vunpack.c.l.s4 1934713408
      %v862 = vunpack.c.0.s8 %v861
      %v863 = vperm.slane %v855, %v862
      %v864 = vrot.slane %v827, 4
      %v865 = vsel %vm556, %v864, %v815
      %v866 = vrot.slane %v815, 4
      %v867 = vsel %vm556, %v827, %v866
      %v869 = vunpack.c.l.s4 1934713408
      %v870 = vunpack.c.0.s8 %v869
      %v871 = vperm.slane %v865, %v870
      %v873 = vunpack.c.l.s4 1934713408
      %v874 = vunpack.c.0.s8 %v873
      %v875 = vperm.slane %v867, %v874
      %v876 = vrot.slane %v859, 4
      %v877 = vsel %vm556, %v876, %v835
      %v878 = vrot.slane %v835, 4
      %v879 = vsel %vm556, %v859, %v878
      %v880 = vrot.slane %v863, 4
      %v881 = vsel %vm556, %v880, %v839
      %v882 = vrot.slane %v839, 4
      %v883 = vsel %vm556, %v863, %v882
      %v884 = vrot.slane %v871, 4
      %v885 = vsel %vm556, %v884, %v847
      %v886 = vrot.slane %v847, 4
      %v887 = vsel %vm556, %v871, %v886
      %v888 = vrot.slane %v875, 4
      %v889 = vsel %vm556, %v888, %v851
      %v890 = vrot.slane %v851, 4
      %v891 = vsel %vm556, %v875, %v890
      %v892 = vrot.slane %v483, 4
      %v893 = vsel %vm556, %v892, %v457
      %v894 = vrot.slane %v457, 4
      %v895 = vsel %vm556, %v483, %v894
      %v897 = vunpack.c.l.s4 1983009808
      %v898 = vunpack.c.0.s8 %v897
      %v899 = vperm.slane %v893, %v898
      %v901 = vunpack.c.l.s4 1983009808
      %v902 = vunpack.c.0.s8 %v901
      %v903 = vperm.slane %v895, %v902
      %v904 = vrot.slane %v496, 4
      %v905 = vsel %vm556, %v904, %v470
      %v906 = vrot.slane %v470, 4
      %v907 = vsel %vm556, %v496, %v906
      %v909 = vunpack.c.l.s4 1983009808
      %v910 = vunpack.c.0.s8 %v909
      %v911 = vperm.slane %v905, %v910
      %v913 = vunpack.c.l.s4 1983009808
      %v914 = vunpack.c.0.s8 %v913
      %v915 = vperm.slane %v907, %v914
      %v916 = vrot.slane %v535, 4
      %v917 = vsel %vm556, %v916, %v509
      %v918 = vrot.slane %v509, 4
      %v919 = vsel %vm556, %v535, %v918
      %v921 = vunpack.c.l.s4 1983009808
      %v922 = vunpack.c.0.s8 %v921
      %v923 = vperm.slane %v917, %v922
      %v925 = vunpack.c.l.s4 1983009808
      %v926 = vunpack.c.0.s8 %v925
      %v927 = vperm.slane %v919, %v926
      %v928 = vrot.slane %v548, 4
      %v929 = vsel %vm556, %v928, %v522
      %v930 = vrot.slane %v522, 4
      %v931 = vsel %vm556, %v548, %v930
      %v933 = vunpack.c.l.s4 1983009808
      %v934 = vunpack.c.0.s8 %v933
      %v935 = vperm.slane %v929, %v934
      %v937 = vunpack.c.l.s4 1983009808
      %v938 = vunpack.c.0.s8 %v937
      %v939 = vperm.slane %v931, %v938
      %v940 = vrot.slane %v911, 4
      %v941 = vsel %vm556, %v940, %v899
      %v942 = vrot.slane %v899, 4
      %v943 = vsel %vm556, %v911, %v942
      %v945 = vunpack.c.l.s4 1934713408
      %v946 = vunpack.c.0.s8 %v945
      %v947 = vperm.slane %v941, %v946
      %v949 = vunpack.c.l.s4 1934713408
      %v950 = vunpack.c.0.s8 %v949
      %v951 = vperm.slane %v943, %v950
      %v952 = vrot.slane %v915, 4
      %v953 = vsel %vm556, %v952, %v903
      %v954 = vrot.slane %v903, 4
      %v955 = vsel %vm556, %v915, %v954
      %v957 = vunpack.c.l.s4 1934713408
      %v958 = vunpack.c.0.s8 %v957
      %v959 = vperm.slane %v953, %v958
      %v961 = vunpack.c.l.s4 1934713408
      %v962 = vunpack.c.0.s8 %v961
      %v963 = vperm.slane %v955, %v962
      %v964 = vrot.slane %v935, 4
      %v965 = vsel %vm556, %v964, %v923
      %v966 = vrot.slane %v923, 4
      %v967 = vsel %vm556, %v935, %v966
      %v969 = vunpack.c.l.s4 1934713408
      %v970 = vunpack.c.0.s8 %v969
      %v971 = vperm.slane %v965, %v970
      %v973 = vunpack.c.l.s4 1934713408
      %v974 = vunpack.c.0.s8 %v973
      %v975 = vperm.slane %v967, %v974
      %v976 = vrot.slane %v939, 4
      %v977 = vsel %vm556, %v976, %v927
      %v978 = vrot.slane %v927, 4
      %v979 = vsel %vm556, %v939, %v978
      %v981 = vunpack.c.l.s4 1934713408
      %v982 = vunpack.c.0.s8 %v981
      %v983 = vperm.slane %v977, %v982
      %v985 = vunpack.c.l.s4 1934713408
      %v986 = vunpack.c.0.s8 %v985
      %v987 = vperm.slane %v979, %v986
      %v988 = vrot.slane %v971, 4
      %v989 = vsel %vm556, %v988, %v947
      %v990 = vrot.slane %v947, 4
      %v991 = vsel %vm556, %v971, %v990
      %v992 = vrot.slane %v975, 4
      %v993 = vsel %vm556, %v992, %v951
      %v994 = vrot.slane %v951, 4
      %v995 = vsel %vm556, %v975, %v994
      %v996 = vrot.slane %v983, 4
      %v997 = vsel %vm556, %v996, %v959
      %v998 = vrot.slane %v959, 4
      %v999 = vsel %vm556, %v983, %v998
      %v1000 = vrot.slane %v987, 4
      %v1001 = vsel %vm556, %v1000, %v963
      %v1002 = vrot.slane %v963, 4
      %v1003 = vsel %vm556, %v987, %v1002
      %v1004 = vrot.slane %v177, 4
      %v1005 = vsel %vm556, %v1004, %v151
      %v1006 = vrot.slane %v151, 4
      %v1007 = vsel %vm556, %v177, %v1006
      %v1009 = vunpack.c.l.s4 1983009808
      %v1010 = vunpack.c.0.s8 %v1009
      %v1011 = vperm.slane %v1005, %v1010
      %v1013 = vunpack.c.l.s4 1983009808
      %v1014 = vunpack.c.0.s8 %v1013
      %v1015 = vperm.slane %v1007, %v1014
      %v1016 = vrot.slane %v190, 4
      %v1017 = vsel %vm556, %v1016, %v164
      %v1018 = vrot.slane %v164, 4
      %v1019 = vsel %vm556, %v190, %v1018
      %v1021 = vunpack.c.l.s4 1983009808
      %v1022 = vunpack.c.0.s8 %v1021
      %v1023 = vperm.slane %v1017, %v1022
      %v1025 = vunpack.c.l.s4 1983009808
      %v1026 = vunpack.c.0.s8 %v1025
      %v1027 = vperm.slane %v1019, %v1026
      %v1028 = vrot.slane %v229, 4
      %v1029 = vsel %vm556, %v1028, %v203
      %v1030 = vrot.slane %v203, 4
      %v1031 = vsel %vm556, %v229, %v1030
      %v1033 = vunpack.c.l.s4 1983009808
      %v1034 = vunpack.c.0.s8 %v1033
      %v1035 = vperm.slane %v1029, %v1034
      %v1037 = vunpack.c.l.s4 1983009808
      %v1038 = vunpack.c.0.s8 %v1037
      %v1039 = vperm.slane %v1031, %v1038
      %v1040 = vrot.slane %v242, 4
      %v1041 = vsel %vm556, %v1040, %v216
      %v1042 = vrot.slane %v216, 4
      %v1043 = vsel %vm556, %v242, %v1042
      %v1045 = vunpack.c.l.s4 1983009808
      %v1046 = vunpack.c.0.s8 %v1045
      %v1047 = vperm.slane %v1041, %v1046
      %v1049 = vunpack.c.l.s4 1983009808
      %v1050 = vunpack.c.0.s8 %v1049
      %v1051 = vperm.slane %v1043, %v1050
      %v1052 = vrot.slane %v1023, 4
      %v1053 = vsel %vm556, %v1052, %v1011
      %v1054 = vrot.slane %v1011, 4
      %v1055 = vsel %vm556, %v1023, %v1054
      %v1057 = vunpack.c.l.s4 1934713408
      %v1058 = vunpack.c.0.s8 %v1057
      %v1059 = vperm.slane %v1053, %v1058
      %v1061 = vunpack.c.l.s4 1934713408
      %v1062 = vunpack.c.0.s8 %v1061
      %v1063 = vperm.slane %v1055, %v1062
      %v1064 = vrot.slane %v1027, 4
      %v1065 = vsel %vm556, %v1064, %v1015
      %v1066 = vrot.slane %v1015, 4
      %v1067 = vsel %vm556, %v1027, %v1066
      %v1069 = vunpack.c.l.s4 1934713408
      %v1070 = vunpack.c.0.s8 %v1069
      %v1071 = vperm.slane %v1065, %v1070
      %v1073 = vunpack.c.l.s4 1934713408
      %v1074 = vunpack.c.0.s8 %v1073
      %v1075 = vperm.slane %v1067, %v1074
      %v1076 = vrot.slane %v1047, 4
      %v1077 = vsel %vm556, %v1076, %v1035
      %v1078 = vrot.slane %v1035, 4
      %v1079 = vsel %vm556, %v1047, %v1078
      %v1081 = vunpack.c.l.s4 1934713408
      %v1082 = vunpack.c.0.s8 %v1081
      %v1083 = vperm.slane %v1077, %v1082
      %v1085 = vunpack.c.l.s4 1934713408
      %v1086 = vunpack.c.0.s8 %v1085
      %v1087 = vperm.slane %v1079, %v1086
      %v1088 = vrot.slane %v1051, 4
      %v1089 = vsel %vm556, %v1088, %v1039
      %v1090 = vrot.slane %v1039, 4
      %v1091 = vsel %vm556, %v1051, %v1090
      %v1093 = vunpack.c.l.s4 1934713408
      %v1094 = vunpack.c.0.s8 %v1093
      %v1095 = vperm.slane %v1089, %v1094
      %v1097 = vunpack.c.l.s4 1934713408
      %v1098 = vunpack.c.0.s8 %v1097
      %v1099 = vperm.slane %v1091, %v1098
      %v1100 = vrot.slane %v1083, 4
      %v1101 = vsel %vm556, %v1100, %v1059
      %v1102 = vrot.slane %v1059, 4
      %v1103 = vsel %vm556, %v1083, %v1102
      %v1104 = vrot.slane %v1087, 4
      %v1105 = vsel %vm556, %v1104, %v1063
      %v1106 = vrot.slane %v1063, 4
      %v1107 = vsel %vm556, %v1087, %v1106
      %v1108 = vrot.slane %v1095, 4
      %v1109 = vsel %vm556, %v1108, %v1071
      %v1110 = vrot.slane %v1071, 4
      %v1111 = vsel %vm556, %v1095, %v1110
      %v1112 = vrot.slane %v1099, 4
      %v1113 = vsel %vm556, %v1112, %v1075
      %v1114 = vrot.slane %v1075, 4
      %v1115 = vsel %vm556, %v1099, %v1114
      %v1116 = vrot.slane %v281, 4
      %v1117 = vsel %vm556, %v1116, %v255
      %v1118 = vrot.slane %v255, 4
      %v1119 = vsel %vm556, %v281, %v1118
      %v1121 = vunpack.c.l.s4 1983009808
      %v1122 = vunpack.c.0.s8 %v1121
      %v1123 = vperm.slane %v1117, %v1122
      %v1125 = vunpack.c.l.s4 1983009808
      %v1126 = vunpack.c.0.s8 %v1125
      %v1127 = vperm.slane %v1119, %v1126
      %v1128 = vrot.slane %v294, 4
      %v1129 = vsel %vm556, %v1128, %v268
      %v1130 = vrot.slane %v268, 4
      %v1131 = vsel %vm556, %v294, %v1130
      %v1133 = vunpack.c.l.s4 1983009808
      %v1134 = vunpack.c.0.s8 %v1133
      %v1135 = vperm.slane %v1129, %v1134
      %v1137 = vunpack.c.l.s4 1983009808
      %v1138 = vunpack.c.0.s8 %v1137
      %v1139 = vperm.slane %v1131, %v1138
      %v1140 = vrot.slane %v333, 4
      %v1141 = vsel %vm556, %v1140, %v307
      %v1142 = vrot.slane %v307, 4
      %v1143 = vsel %vm556, %v333, %v1142
      %v1145 = vunpack.c.l.s4 1983009808
      %v1146 = vunpack.c.0.s8 %v1145
      %v1147 = vperm.slane %v1141, %v1146
      %v1149 = vunpack.c.l.s4 1983009808
      %v1150 = vunpack.c.0.s8 %v1149
      %v1151 = vperm.slane %v1143, %v1150
      %v1152 = vrot.slane %v346, 4
      %v1153 = vsel %vm556, %v1152, %v320
      %v1154 = vrot.slane %v320, 4
      %v1155 = vsel %vm556, %v346, %v1154
      %v1157 = vunpack.c.l.s4 1983009808
      %v1158 = vunpack.c.0.s8 %v1157
      %v1159 = vperm.slane %v1153, %v1158
      %v1161 = vunpack.c.l.s4 1983009808
      %v1162 = vunpack.c.0.s8 %v1161
      %v1163 = vperm.slane %v1155, %v1162
      %v1164 = vrot.slane %v1135, 4
      %v1165 = vsel %vm556, %v1164, %v1123
      %v1166 = vrot.slane %v1123, 4
      %v1167 = vsel %vm556, %v1135, %v1166
      %v1169 = vunpack.c.l.s4 1934713408
      %v1170 = vunpack.c.0.s8 %v1169
      %v1171 = vperm.slane %v1165, %v1170
      %v1173 = vunpack.c.l.s4 1934713408
      %v1174 = vunpack.c.0.s8 %v1173
      %v1175 = vperm.slane %v1167, %v1174
      %v1176 = vrot.slane %v1139, 4
      %v1177 = vsel %vm556, %v1176, %v1127
      %v1178 = vrot.slane %v1127, 4
      %v1179 = vsel %vm556, %v1139, %v1178
      %v1181 = vunpack.c.l.s4 1934713408
      %v1182 = vunpack.c.0.s8 %v1181
      %v1183 = vperm.slane %v1177, %v1182
      %v1185 = vunpack.c.l.s4 1934713408
      %v1186 = vunpack.c.0.s8 %v1185
      %v1187 = vperm.slane %v1179, %v1186
      %v1188 = vrot.slane %v1159, 4
      %v1189 = vsel %vm556, %v1188, %v1147
      %v1190 = vrot.slane %v1147, 4
      %v1191 = vsel %vm556, %v1159, %v1190
      %v1193 = vunpack.c.l.s4 1934713408
      %v1194 = vunpack.c.0.s8 %v1193
      %v1195 = vperm.slane %v1189, %v1194
      %v1197 = vunpack.c.l.s4 1934713408
      %v1198 = vunpack.c.0.s8 %v1197
      %v1199 = vperm.slane %v1191, %v1198
      %v1200 = vrot.slane %v1163, 4
      %v1201 = vsel %vm556, %v1200, %v1151
      %v1202 = vrot.slane %v1151, 4
      %v1203 = vsel %vm556, %v1163, %v1202
      %v1205 = vunpack.c.l.s4 1934713408
      %v1206 = vunpack.c.0.s8 %v1205
      %v1207 = vperm.slane %v1201, %v1206
      %v1209 = vunpack.c.l.s4 1934713408
      %v1210 = vunpack.c.0.s8 %v1209
      %v1211 = vperm.slane %v1203, %v1210
      %v1212 = vrot.slane %v1195, 4
      %v1213 = vsel %vm556, %v1212, %v1171
      %v1214 = vrot.slane %v1171, 4
      %v1215 = vsel %vm556, %v1195, %v1214
      %v1216 = vrot.slane %v1199, 4
      %v1217 = vsel %vm556, %v1216, %v1175
      %v1218 = vrot.slane %v1175, 4
      %v1219 = vsel %vm556, %v1199, %v1218
      %v1220 = vrot.slane %v1207, 4
      %v1221 = vsel %vm556, %v1220, %v1183
      %v1222 = vrot.slane %v1183, 4
      %v1223 = vsel %vm556, %v1207, %v1222
      %v1224 = vrot.slane %v1211, 4
      %v1225 = vsel %vm556, %v1224, %v1187
      %v1226 = vrot.slane %v1187, 4
      %v1227 = vsel %vm556, %v1211, %v1226
      %v1228 = vrot.slane %v385, 4
      %v1229 = vsel %vm556, %v1228, %v359
      %v1230 = vrot.slane %v359, 4
      %v1231 = vsel %vm556, %v385, %v1230
      %v1233 = vunpack.c.l.s4 1983009808
      %v1234 = vunpack.c.0.s8 %v1233
      %v1235 = vperm.slane %v1229, %v1234
      %v1237 = vunpack.c.l.s4 1983009808
      %v1238 = vunpack.c.0.s8 %v1237
      %v1239 = vperm.slane %v1231, %v1238
      %v1240 = vrot.slane %v398, 4
      %v1241 = vsel %vm556, %v1240, %v372
      %v1242 = vrot.slane %v372, 4
      %v1243 = vsel %vm556, %v398, %v1242
      %v1245 = vunpack.c.l.s4 1983009808
      %v1246 = vunpack.c.0.s8 %v1245
      %v1247 = vperm.slane %v1241, %v1246
      %v1249 = vunpack.c.l.s4 1983009808
      %v1250 = vunpack.c.0.s8 %v1249
      %v1251 = vperm.slane %v1243, %v1250
      %v1252 = vrot.slane %v437, 4
      %v1253 = vsel %vm556, %v1252, %v411
      %v1254 = vrot.slane %v411, 4
      %v1255 = vsel %vm556, %v437, %v1254
      %v1257 = vunpack.c.l.s4 1983009808
      %v1258 = vunpack.c.0.s8 %v1257
      %v1259 = vperm.slane %v1253, %v1258
      %v1261 = vunpack.c.l.s4 1983009808
      %v1262 = vunpack.c.0.s8 %v1261
      %v1263 = vperm.slane %v1255, %v1262
      %v1264 = vrot.slane %v450, 4
      %v1265 = vsel %vm556, %v1264, %v424
      %v1266 = vrot.slane %v424, 4
      %v1267 = vsel %vm556, %v450, %v1266
      %v1269 = vunpack.c.l.s4 1983009808
      %v1270 = vunpack.c.0.s8 %v1269
      %v1271 = vperm.slane %v1265, %v1270
      %v1273 = vunpack.c.l.s4 1983009808
      %v1274 = vunpack.c.0.s8 %v1273
      %v1275 = vperm.slane %v1267, %v1274
      %v1276 = vrot.slane %v1247, 4
      %v1277 = vsel %vm556, %v1276, %v1235
      %v1278 = vrot.slane %v1235, 4
      %v1279 = vsel %vm556, %v1247, %v1278
      %v1281 = vunpack.c.l.s4 1934713408
      %v1282 = vunpack.c.0.s8 %v1281
      %v1283 = vperm.slane %v1277, %v1282
      %v1285 = vunpack.c.l.s4 1934713408
      %v1286 = vunpack.c.0.s8 %v1285
      %v1287 = vperm.slane %v1279, %v1286
      %v1288 = vrot.slane %v1251, 4
      %v1289 = vsel %vm556, %v1288, %v1239
      %v1290 = vrot.slane %v1239, 4
      %v1291 = vsel %vm556, %v1251, %v1290
      %v1293 = vunpack.c.l.s4 1934713408
      %v1294 = vunpack.c.0.s8 %v1293
      %v1295 = vperm.slane %v1289, %v1294
      %v1297 = vunpack.c.l.s4 1934713408
      %v1298 = vunpack.c.0.s8 %v1297
      %v1299 = vperm.slane %v1291, %v1298
      %v1300 = vrot.slane %v1271, 4
      %v1301 = vsel %vm556, %v1300, %v1259
      %v1302 = vrot.slane %v1259, 4
      %v1303 = vsel %vm556, %v1271, %v1302
      %v1305 = vunpack.c.l.s4 1934713408
      %v1306 = vunpack.c.0.s8 %v1305
      %v1307 = vperm.slane %v1301, %v1306
      %v1309 = vunpack.c.l.s4 1934713408
      %v1310 = vunpack.c.0.s8 %v1309
      %v1311 = vperm.slane %v1303, %v1310
      %v1312 = vrot.slane %v1275, 4
      %v1313 = vsel %vm556, %v1312, %v1263
      %v1314 = vrot.slane %v1263, 4
      %v1315 = vsel %vm556, %v1275, %v1314
      %v1317 = vunpack.c.l.s4 1934713408
      %v1318 = vunpack.c.0.s8 %v1317
      %v1319 = vperm.slane %v1313, %v1318
      %v1321 = vunpack.c.l.s4 1934713408
      %v1322 = vunpack.c.0.s8 %v1321
      %v1323 = vperm.slane %v1315, %v1322
      %v1324 = vrot.slane %v1307, 4
      %v1325 = vsel %vm556, %v1324, %v1283
      %v1326 = vrot.slane %v1283, 4
      %v1327 = vsel %vm556, %v1307, %v1326
      %v1328 = vrot.slane %v1311, 4
      %v1329 = vsel %vm556, %v1328, %v1287
      %v1330 = vrot.slane %v1287, 4
      %v1331 = vsel %vm556, %v1311, %v1330
      %v1332 = vrot.slane %v1319, 4
      %v1333 = vsel %vm556, %v1332, %v1295
      %v1334 = vrot.slane %v1295, 4
      %v1335 = vsel %vm556, %v1319, %v1334
      %v1336 = vrot.slane %v1323, 4
      %v1337 = vsel %vm556, %v1336, %v1299
      %v1338 = vrot.slane %v1299, 4
      %v1339 = vsel %vm556, %v1323, %v1338
      %v1340 = vrot.slane %v489, 4
      %v1341 = vsel %vm556, %v1340, %v463
      %v1342 = vrot.slane %v463, 4
      %v1343 = vsel %vm556, %v489, %v1342
      %v1345 = vunpack.c.l.s4 1983009808
      %v1346 = vunpack.c.0.s8 %v1345
      %v1347 = vperm.slane %v1341, %v1346
      %v1349 = vunpack.c.l.s4 1983009808
      %v1350 = vunpack.c.0.s8 %v1349
      %v1351 = vperm.slane %v1343, %v1350
      %v1352 = vrot.slane %v502, 4
      %v1353 = vsel %vm556, %v1352, %v476
      %v1354 = vrot.slane %v476, 4
      %v1355 = vsel %vm556, %v502, %v1354
      %v1357 = vunpack.c.l.s4 1983009808
      %v1358 = vunpack.c.0.s8 %v1357
      %v1359 = vperm.slane %v1353, %v1358
      %v1361 = vunpack.c.l.s4 1983009808
      %v1362 = vunpack.c.0.s8 %v1361
      %v1363 = vperm.slane %v1355, %v1362
      %v1364 = vrot.slane %v541, 4
      %v1365 = vsel %vm556, %v1364, %v515
      %v1366 = vrot.slane %v515, 4
      %v1367 = vsel %vm556, %v541, %v1366
      %v1369 = vunpack.c.l.s4 1983009808
      %v1370 = vunpack.c.0.s8 %v1369
      %v1371 = vperm.slane %v1365, %v1370
      %v1373 = vunpack.c.l.s4 1983009808
      %v1374 = vunpack.c.0.s8 %v1373
      %v1375 = vperm.slane %v1367, %v1374
      %v1376 = vrot.slane %v554, 4
      %v1377 = vsel %vm556, %v1376, %v528
      %v1378 = vrot.slane %v528, 4
      %v1379 = vsel %vm556, %v554, %v1378
      %v1381 = vunpack.c.l.s4 1983009808
      %v1382 = vunpack.c.0.s8 %v1381
      %v1383 = vperm.slane %v1377, %v1382
      %v1385 = vunpack.c.l.s4 1983009808
      %v1386 = vunpack.c.0.s8 %v1385
      %v1387 = vperm.slane %v1379, %v1386
      %v1388 = vrot.slane %v1359, 4
      %v1389 = vsel %vm556, %v1388, %v1347
      %v1390 = vrot.slane %v1347, 4
      %v1391 = vsel %vm556, %v1359, %v1390
      %v1393 = vunpack.c.l.s4 1934713408
      %v1394 = vunpack.c.0.s8 %v1393
      %v1395 = vperm.slane %v1389, %v1394
      %v1397 = vunpack.c.l.s4 1934713408
      %v1398 = vunpack.c.0.s8 %v1397
      %v1399 = vperm.slane %v1391, %v1398
      %v1400 = vrot.slane %v1363, 4
      %v1401 = vsel %vm556, %v1400, %v1351
      %v1402 = vrot.slane %v1351, 4
      %v1403 = vsel %vm556, %v1363, %v1402
      %v1405 = vunpack.c.l.s4 1934713408
      %v1406 = vunpack.c.0.s8 %v1405
      %v1407 = vperm.slane %v1401, %v1406
      %v1409 = vunpack.c.l.s4 1934713408
      %v1410 = vunpack.c.0.s8 %v1409
      %v1411 = vperm.slane %v1403, %v1410
      %v1412 = vrot.slane %v1383, 4
      %v1413 = vsel %vm556, %v1412, %v1371
      %v1414 = vrot.slane %v1371, 4
      %v1415 = vsel %vm556, %v1383, %v1414
      %v1417 = vunpack.c.l.s4 1934713408
      %v1418 = vunpack.c.0.s8 %v1417
      %v1419 = vperm.slane %v1413, %v1418
      %v1421 = vunpack.c.l.s4 1934713408
      %v1422 = vunpack.c.0.s8 %v1421
      %v1423 = vperm.slane %v1415, %v1422
      %v1424 = vrot.slane %v1387, 4
      %v1425 = vsel %vm556, %v1424, %v1375
      %v1426 = vrot.slane %v1375, 4
      %v1427 = vsel %vm556, %v1387, %v1426
      %v1429 = vunpack.c.l.s4 1934713408
      %v1430 = vunpack.c.0.s8 %v1429
      %v1431 = vperm.slane %v1425, %v1430
      %v1433 = vunpack.c.l.s4 1934713408
      %v1434 = vunpack.c.0.s8 %v1433
      %v1435 = vperm.slane %v1427, %v1434
      %v1436 = vrot.slane %v1419, 4
      %v1437 = vsel %vm556, %v1436, %v1395
      %v1438 = vrot.slane %v1395, 4
      %v1439 = vsel %vm556, %v1419, %v1438
      %v1440 = vrot.slane %v1423, 4
      %v1441 = vsel %vm556, %v1440, %v1399
      %v1442 = vrot.slane %v1399, 4
      %v1443 = vsel %vm556, %v1423, %v1442
      %v1444 = vrot.slane %v1431, 4
      %v1445 = vsel %vm556, %v1444, %v1407
      %v1446 = vrot.slane %v1407, 4
      %v1447 = vsel %vm556, %v1431, %v1446
      %v1448 = vrot.slane %v1435, 4
      %v1449 = vsel %vm556, %v1448, %v1411
      %v1450 = vrot.slane %v1411, 4
      %v1451 = vsel %vm556, %v1435, %v1450
      %1456 = vrot.lane.b32.xlu0 %v655, 2
      %v1457 = vpop.permute.xlu0 %1456
      %1458 = vrot.lane.b32.xlu0 %v767, 2
      %v1459 = vpop.permute.xlu0 %1458
      %1460 = vrot.lane.b32.xlu0 %v879, 2
      %v1461 = vpop.permute.xlu0 %1460
      %1462 = vrot.lane.b32.xlu0 %v991, 2
      %v1463 = vpop.permute.xlu0 %1462
      %1472 = vrot.lane.b32.xlu0 %v657, 4
      %v1473 = vpop.permute.xlu0 %1472
      %1474 = vrot.lane.b32.xlu0 %v769, 4
      %v1475 = vpop.permute.xlu0 %1474
      %1476 = vrot.lane.b32.xlu0 %v881, 4
      %v1477 = vpop.permute.xlu0 %1476
      %1478 = vrot.lane.b32.xlu0 %v993, 4
      %v1479 = vpop.permute.xlu0 %1478
      %1488 = vrot.lane.b32.xlu0 %v659, 6
      %v1489 = vpop.permute.xlu0 %1488
      %1490 = vrot.lane.b32.xlu0 %v771, 6
      %v1491 = vpop.permute.xlu0 %1490
      %1492 = vrot.lane.b32.xlu0 %v883, 6
      %v1493 = vpop.permute.xlu0 %1492
      %1494 = vrot.lane.b32.xlu0 %v995, 6
      %v1495 = vpop.permute.xlu0 %1494
      %1504 = vrot.lane.b32.xlu0 %v661, 8
      %v1505 = vpop.permute.xlu0 %1504
      %1506 = vrot.lane.b32.xlu0 %v773, 8
      %v1507 = vpop.permute.xlu0 %1506
      %1508 = vrot.lane.b32.xlu0 %v885, 8
      %v1509 = vpop.permute.xlu0 %1508
      %1510 = vrot.lane.b32.xlu0 %v997, 8
      %v1511 = vpop.permute.xlu0 %1510
      %1520 = vrot.lane.b32.xlu0 %v663, 10
      %v1521 = vpop.permute.xlu0 %1520
      %1522 = vrot.lane.b32.xlu0 %v775, 10
      %v1523 = vpop.permute.xlu0 %1522
      %1524 = vrot.lane.b32.xlu0 %v887, 10
      %v1525 = vpop.permute.xlu0 %1524
      %1526 = vrot.lane.b32.xlu0 %v999, 10
      %v1527 = vpop.permute.xlu0 %1526
      %1536 = vrot.lane.b32.xlu0 %v665, 12
      %v1537 = vpop.permute.xlu0 %1536
      %1538 = vrot.lane.b32.xlu0 %v777, 12
      %v1539 = vpop.permute.xlu0 %1538
      %1540 = vrot.lane.b32.xlu0 %v889, 12
      %v1541 = vpop.permute.xlu0 %1540
      %1542 = vrot.lane.b32.xlu0 %v1001, 12
      %v1543 = vpop.permute.xlu0 %1542
      %1552 = vrot.lane.b32.xlu0 %v667, 14
      %v1553 = vpop.permute.xlu0 %1552
      %1554 = vrot.lane.b32.xlu0 %v779, 14
      %v1555 = vpop.permute.xlu0 %1554
      %1556 = vrot.lane.b32.xlu0 %v891, 14
      %v1557 = vpop.permute.xlu0 %1556
      %1558 = vrot.lane.b32.xlu0 %v1003, 14
      %v1559 = vpop.permute.xlu0 %1558
      %1568 = vrot.lane.b32.xlu0 %v1101, 16
      %v1569 = vpop.permute.xlu0 %1568
      %1570 = vrot.lane.b32.xlu0 %v1213, 16
      %v1571 = vpop.permute.xlu0 %1570
      %1572 = vrot.lane.b32.xlu0 %v1325, 16
      %v1573 = vpop.permute.xlu0 %1572
      %1574 = vrot.lane.b32.xlu0 %v1437, 16
      %v1575 = vpop.permute.xlu0 %1574
      %1584 = vrot.lane.b32.xlu0 %v1103, 18
      %v1585 = vpop.permute.xlu0 %1584
      %1586 = vrot.lane.b32.xlu0 %v1215, 18
      %v1587 = vpop.permute.xlu0 %1586
      %1588 = vrot.lane.b32.xlu0 %v1327, 18
      %v1589 = vpop.permute.xlu0 %1588
      %1590 = vrot.lane.b32.xlu0 %v1439, 18
      %v1591 = vpop.permute.xlu0 %1590
      %1600 = vrot.lane.b32.xlu0 %v1105, 20
      %v1601 = vpop.permute.xlu0 %1600
      %1602 = vrot.lane.b32.xlu0 %v1217, 20
      %v1603 = vpop.permute.xlu0 %1602
      %1604 = vrot.lane.b32.xlu0 %v1329, 20
      %v1605 = vpop.permute.xlu0 %1604
      %1606 = vrot.lane.b32.xlu0 %v1441, 20
      %v1607 = vpop.permute.xlu0 %1606
      %1616 = vrot.lane.b32.xlu0 %v1107, 22
      %v1617 = vpop.permute.xlu0 %1616
      %1618 = vrot.lane.b32.xlu0 %v1219, 22
      %v1619 = vpop.permute.xlu0 %1618
      %1620 = vrot.lane.b32.xlu0 %v1331, 22
      %v1621 = vpop.permute.xlu0 %1620
      %1622 = vrot.lane.b32.xlu0 %v1443, 22
      %v1623 = vpop.permute.xlu0 %1622
      %1632 = vrot.lane.b32.xlu0 %v1109, 24
      %v1633 = vpop.permute.xlu0 %1632
      %1634 = vrot.lane.b32.xlu0 %v1221, 24
      %v1635 = vpop.permute.xlu0 %1634
      %1636 = vrot.lane.b32.xlu0 %v1333, 24
      %v1637 = vpop.permute.xlu0 %1636
      %1638 = vrot.lane.b32.xlu0 %v1445, 24
      %v1639 = vpop.permute.xlu0 %1638
      %1648 = vrot.lane.b32.xlu0 %v1111, 26
      %v1649 = vpop.permute.xlu0 %1648
      %1650 = vrot.lane.b32.xlu0 %v1223, 26
      %v1651 = vpop.permute.xlu0 %1650
      %1652 = vrot.lane.b32.xlu0 %v1335, 26
      %v1653 = vpop.permute.xlu0 %1652
      %1654 = vrot.lane.b32.xlu0 %v1447, 26
      %v1655 = vpop.permute.xlu0 %1654
      %1664 = vrot.lane.b32.xlu0 %v1113, 28
      %v1665 = vpop.permute.xlu0 %1664
      %1666 = vrot.lane.b32.xlu0 %v1225, 28
      %v1667 = vpop.permute.xlu0 %1666
      %1668 = vrot.lane.b32.xlu0 %v1337, 28
      %v1669 = vpop.permute.xlu0 %1668
      %1670 = vrot.lane.b32.xlu0 %v1449, 28
      %v1671 = vpop.permute.xlu0 %1670
      %1680 = vrot.lane.b32.xlu0 %v1115, 30
      %v1681 = vpop.permute.xlu0 %1680
      %1682 = vrot.lane.b32.xlu0 %v1227, 30
      %v1683 = vpop.permute.xlu0 %1682
      %1684 = vrot.lane.b32.xlu0 %v1339, 30
      %v1685 = vpop.permute.xlu0 %1684
      %1686 = vrot.lane.b32.xlu0 %v1451, 30
      %v1687 = vpop.permute.xlu0 %1686
      %vm1692 = vcmask 15360
      %v1693 = vsel %vm1692, %v653, %v1457
      %v1694 = vsel %vm1692, %v765, %v1459
      %v1695 = vsel %vm1692, %v877, %v1461
      %v1696 = vsel %vm1692, %v989, %v1463
      %vm1697 = vcmask 31744
      %v1698 = vsel %vm1697, %v1693, %v1473
      %v1699 = vsel %vm1697, %v1694, %v1475
      %v1700 = vsel %vm1697, %v1695, %v1477
      %v1701 = vsel %vm1697, %v1696, %v1479
      %vm1702 = vcmask 48128
      %v1703 = vsel %vm1702, %v1698, %v1489
      %v1704 = vsel %vm1702, %v1699, %v1491
      %v1705 = vsel %vm1702, %v1700, %v1493
      %v1706 = vsel %vm1702, %v1701, %v1495
      %vm1707 = vcmask 64512
      %v1708 = vsel %vm1707, %v1703, %v1505
      %v1709 = vsel %vm1707, %v1704, %v1507
      %v1710 = vsel %vm1707, %v1705, %v1509
      %v1711 = vsel %vm1707, %v1706, %v1511
      %vm1712 = vcmask 80896
      %v1713 = vsel %vm1712, %v1708, %v1521
      %v1714 = vsel %vm1712, %v1709, %v1523
      %v1715 = vsel %vm1712, %v1710, %v1525
      %v1716 = vsel %vm1712, %v1711, %v1527
      %vm1717 = vcmask 97280
      %v1718 = vsel %vm1717, %v1713, %v1537
      %v1719 = vsel %vm1717, %v1714, %v1539
      %v1720 = vsel %vm1717, %v1715, %v1541
      %v1721 = vsel %vm1717, %v1716, %v1543
      %vm1722 = vcmask 113664
      %v1723 = vsel %vm1722, %v1718, %v1553
      %v1724 = vsel %vm1722, %v1719, %v1555
      %v1725 = vsel %vm1722, %v1720, %v1557
      %v1726 = vsel %vm1722, %v1721, %v1559
      %vm1727 = vcmask 130048
      %v1728 = vsel %vm1727, %v1723, %v1569
      %v1729 = vsel %vm1727, %v1724, %v1571
      %v1730 = vsel %vm1727, %v1725, %v1573
      %v1731 = vsel %vm1727, %v1726, %v1575
      %vm1732 = vcmask 146432
      %v1733 = vsel %vm1732, %v1728, %v1585
      %v1734 = vsel %vm1732, %v1729, %v1587
      %v1735 = vsel %vm1732, %v1730, %v1589
      %v1736 = vsel %vm1732, %v1731, %v1591
      %vm1737 = vcmask 162816
      %v1738 = vsel %vm1737, %v1733, %v1601
      %v1739 = vsel %vm1737, %v1734, %v1603
      %v1740 = vsel %vm1737, %v1735, %v1605
      %v1741 = vsel %vm1737, %v1736, %v1607
      %vm1742 = vcmask 179200
      %v1743 = vsel %vm1742, %v1738, %v1617
      %v1744 = vsel %vm1742, %v1739, %v1619
      %v1745 = vsel %vm1742, %v1740, %v1621
      %v1746 = vsel %vm1742, %v1741, %v1623
      %vm1747 = vcmask 195584
      %v1748 = vsel %vm1747, %v1743, %v1633
      %v1749 = vsel %vm1747, %v1744, %v1635
      %v1750 = vsel %vm1747, %v1745, %v1637
      %v1751 = vsel %vm1747, %v1746, %v1639
      %vm1752 = vcmask 211968
      %v1753 = vsel %vm1752, %v1748, %v1649
      %v1754 = vsel %vm1752, %v1749, %v1651
      %v1755 = vsel %vm1752, %v1750, %v1653
      %v1756 = vsel %vm1752, %v1751, %v1655
      %vm1757 = vcmask 228352
      %v1758 = vsel %vm1757, %v1753, %v1665
      %v1759 = vsel %vm1757, %v1754, %v1667
      %v1760 = vsel %vm1757, %v1755, %v1669
      %v1761 = vsel %vm1757, %v1756, %v1671
      %vm1762 = vcmask 244736
      %v1763 = vsel %vm1762, %v1758, %v1681
      %v1764 = vsel %vm1762, %v1759, %v1683
      %v1765 = vsel %vm1762, %v1760, %v1685
      %v1766 = vsel %vm1762, %v1761, %v1687
      %v1767 = vsel %vm134, %v1763, 0.0
      %v1768 = vsel %vm134, %v1764, 0.0
      %v1769 = vsel %vm134, %v1765, 0.0
      %v1770 = vsel %vm134, %v1766, 0.0
      %vm1771 = vcmask 261120
      %1772 = vst.msk [vmem:[%s118] sm:$0xff] %vm1771, %v1767
      %1773 = vst.msk [vmem:[%s118 + $0x8] sm:$0xff] %vm1771, %v1768
      %1774 = vst.msk [vmem:[%s118 + $0x10] sm:$0xff] %vm1771, %v1769
      %1775 = vst.msk [vmem:[%s118 + $0x18] sm:$0xff] %vm1771, %v1770
      %vm1776 = vcmask 523520
      %1777 = vst.msk [vmem:[%s118] sm:$0xff] %vm1776, 0.0
      %1778 = vst.msk [vmem:[%s118 + $0x8] sm:$0xff] %vm1776, 0.0
      %1779 = vst.msk [vmem:[%s118 + $0x10] sm:$0xff] %vm1776, 0.0
      %1780 = vst.msk [vmem:[%s118 + $0x18] sm:$0xff] %vm1776, 0.0
      %s1781 = smul.u32 4, %s12
      %p1782 = scmp.lt.s32.totalorder %s1781, 15
      %s1783 = scalar_select %p1782, %s1781, 15
      %s1784 = smul.addr %s1783, 8
      %s1785 = scalar_lea.vmem %s1, %s1784
      // Predicated region
      $region25: #{tpu_custom_call.1} parent=23 // pred_check
        %p1786 = pneg %p56
      $region26: #{tpu_custom_call.1} parent=23 // pred_check_branch
        %1788 = sbr.rel (%p1786) target = $region28
      $region27: #{tpu_custom_call.1} parent=23 // pred_region
        %s1789 = smul.u32 4, %s12
      $region28: #{tpu_custom_call.1} parent=23 // pred_fallthru
        _
    $region24: #{tpu_custom_call.1} parent=5 // pred_fallthru
      _
    %p1790 = scmp.le.s32.totalorder 2, %s7
    // Predicated region
    $region29: #{tpu_custom_call.1} parent=5 // pred_check
      %p1791 = pneg %p1790
    $region30: #{tpu_custom_call.1} parent=5 // pred_check_branch
      %1793 = sbr.rel (%p1791) target = $region32
    $region31: #{tpu_custom_call.1} parent=5 // pred_region
      %s1794 = ssub.s32 %s7, 2
      // Predicated region
      $region33: #{tpu_custom_call.1} parent=31 // pred_check
        %p1795 = pneg %p62
      $region34: #{tpu_custom_call.1} parent=31 // pred_check_branch
        %1797 = sbr.rel (%p1795) target = $region36
      $region35: #{tpu_custom_call.1} parent=31 // pred_region
        %s1798 = smul.u32 4, %s13
        %p1799 = scmp.lt.s32.totalorder %s1798, 15
        %s1800 = scalar_select %p1799, %s1798, 15
        %s1801 = smul.addr %s1800, 8
        %s1802 = scalar_lea.vmem %s1, %s1801
      $region36: #{tpu_custom_call.1} parent=31 // pred_fallthru
        _
    $region32: #{tpu_custom_call.1} parent=5 // pred_fallthru
      _
  $region6: #{tpu_custom_call.1} parent=0 // loop_footer
    %s11 = sadd.s32 1, %s7
  $region7: #{tpu_custom_call.1} parent=0 // loop_footer_branch
    %6 = sbr.rel target = $region3
  $region8: #{tpu_custom_call.1} parent=0 // loop_exit
    _

</llo_original>
